<compile_context>
chip_gen: v6e
topology: v6e:2x2x1
jax: 0.10.0
libtpu: 0.0.40
codegen_flags: <defaults>
</compile_context>

<pallas_src>
import functools
from typing import NamedTuple

import jax
import jax.numpy as jnp
from jax.experimental import pallas as pl
from jax.experimental.pallas import tpu as pltpu

_LANE = 128
_TILE_ALIGN = 16            # bf16 activations: one vreg holds (16, 128) -> align batch tile to 16


def _round_up(x, m):
    return ((x + m - 1) // m) * m


def _tpu_vmem_info():
    """Returns (per-core VMEM bytes, chip_has_two_tensorcores)."""
    vmem_cap = 64 * 1024 * 1024                      # conservative default (v7x-sized)
    try:
        vmem_cap = int(pltpu.get_tpu_info().vmem_capacity_bytes)
    except Exception:                                # non-TPU backend / older jax: keep default
        pass
    # Heuristic: 64 MiB per-TC VMEM -> v7x (2 TCs/chip); 128 MiB -> v5e / v6e (1 TC/chip).
    two_cores = vmem_cap <= 64 * 1024 * 1024
    return vmem_cap, two_cores


class MLPParams(NamedTuple):
    w_bf: tuple              # per-layer [in_pad, out_pad] bf16 weights (lane-padded)
    bias_cat: jax.Array      # [1, sum(out_pad)] f32, all layer biases concatenated
    out_widths: tuple        # per-layer padded output widths (python ints)
    n_feature: int
    n_output: int


def _pad_params(weights, biases):
    """Zero-pad every layer's output width up to a multiple of 128 lanes (exact math).

    Padded columns of W_i / b_i produce activations relu(0 + 0) = 0, and the matching padded
    *rows* of W_{i+1} are zero, so they contribute nothing.  Layer 0's input feature dim stays
    unpadded so x's HBM traffic does not grow.
    """
    padded_w, padded_b = [], []
    prev_pad = weights[0].shape[0]
    for w, b in zip(weights, biases):
        in_, out_ = w.shape
        out_pad = _round_up(out_, _LANE)
        w_p = jnp.zeros((prev_pad, out_pad), w.dtype).at[:in_, :out_].set(w)
        b_p = jnp.zeros((1, out_pad), b.dtype).at[:, :out_].set(jnp.reshape(b, (1, out_)))
        padded_w.append(w_p)
        padded_b.append(b_p)
        prev_pad = out_pad
    return padded_w, padded_b


def prepare_params(weights, biases):
    """One-time parameter prep (hoisted out of the per-forward hot path — do NOT call per step).

    weights: list of [in_i, out_i] f32 arrays (already transposed vs. PyTorch's [out, in])
    biases:  list of [1, out_i] (or [out_i]) f32 arrays
    """
    assert len(weights) == len(biases) and len(weights) >= 1
    padded_w, padded_b = _pad_params(weights, biases)
    w_bf = tuple(w.astype(jnp.bfloat16) for w in padded_w)     # bf16 MXU weights
    bias_cat = jnp.concatenate(padded_b, axis=1)               # one [1, sum(out_pad)] f32 block
    out_widths = tuple(w.shape[1] for w in padded_w)
    return MLPParams(w_bf=w_bf, bias_cat=bias_cat, out_widths=out_widths,
                     n_feature=int(weights[0].shape[0]),
                     n_output=int(weights[-1].shape[1]))


def _mlp_kernel(out_widths, x_ref, *refs):
    """Fused MLP: bf16 MXU matmuls, f32 accumulation, bias-add + ReLU in f32.

    refs = (w_0, ..., w_{L-1}, bias_cat, out).  The last layer has no ReLU (it is the module's
    `output` Linear).  The Python loop unrolls at trace time (heterogeneous layer shapes), which
    keeps full LLO scheduling visibility.
    """
    out_ref = refs[-1]
    bias_ref = refs[-2]
    w_refs = refs[:-2]
    num_layers = len(w_refs)

    h = x_ref[...]                                   # bf16 activations feed the MXU
    off = 0
    for layer in range(num_layers):
        w = w_refs[layer][...]                       # bf16 [in_pad, out_pad]
        width = out_widths[layer]
        b = bias_ref[:, off:off + width]             # f32 [1, width]   (static 128-aligned slice)
        off += width
        acc = jnp.dot(h, w, preferred_element_type=jnp.float32) + b
        if layer < num_layers - 1:
            acc = jnp.maximum(acc, 0.0)              # f32 elementwise (no bf16 VPU on v5e)
            h = acc.astype(jnp.bfloat16)             # next matmul's LHS back in bf16
        else:
            h = acc
    out_ref[...] = h.astype(out_ref.dtype)           # bf16, lane-dense (>=128-wide) store


def _choose_batch_tile(B, f_in, w_bf, bias_cat, out_pad, max_tile, budget_bytes,
                       single_buffer_params):
    """Largest 16-row-aligned batch tile whose resident VMEM fits the budget.

    Grid-invariant weights/biases are charged once when single-buffered; x/out tiles are
    double-buffered by the pipeline; headroom for the widest layer's live f32 activations.
    Returns (tile, resident_bytes_at_that_tile).
    """
    param_mult = 1 if single_buffer_params else 2
    param_bytes = param_mult * (sum(w.shape[0] * w.shape[1] * 2 for w in w_bf)
                                + bias_cat.size * 4)
    widest = max([f_in, out_pad] + [w.shape[1] for w in w_bf])

    def resident(tile):
        x_bytes = 2 * tile * f_in * 2        # bf16 input tile, double-buffered
        o_bytes = 2 * tile * out_pad * 2     # bf16 output tile, double-buffered
        act_bytes = 2 * tile * widest * 4    # live f32 activations (headroom)
        return param_bytes + x_bytes + o_bytes + act_bytes

    tb = max(_TILE_ALIGN, min(_round_up(max_tile, _TILE_ALIGN), _round_up(B, _TILE_ALIGN)))
    while tb > _TILE_ALIGN and resident(tb) > budget_bytes:
        tb = max(_TILE_ALIGN, _round_up(tb // 2, _TILE_ALIGN))
    return tb, resident(tb)


def mlp_revised_forward(x, params: MLPParams, *, max_batch_tile=512,
                        single_buffer_params=True):
    """Run the fused MLP Pallas kernel.

    x:      [B, F] float32
    params: MLPParams from prepare_params() (padded bf16 weights + concatenated f32 biases).
    """
    B, F = x.shape
    assert F == params.n_feature, "x feature dim does not match the prepared parameters"
    out_pad = params.out_widths[-1]

    vmem_cap, two_cores = _tpu_vmem_info()
    budget = int(vmem_cap * 0.62)                 # tile-sizing budget
    vmem_limit = int(vmem_cap * 0.85)             # scoped VMEM limit handed to Mosaic

    x_bf = x.astype(jnp.bfloat16)                 # bf16 MXU LHS (cheap: B*F elements)

    tb, resident = _choose_batch_tile(B, F, params.w_bf, params.bias_cat, out_pad,
                                      max_batch_tile, budget, single_buffer_params)
    if resident > budget:
        # Wide-layer fallback: parameters alone (nearly) blow the budget at the minimum tile.
        # TODO(synk): tile the widest layer's output dim on an extra "arbitrary" grid axis (or
        # pipeline layer weights via pltpu.emit_pipeline) instead of only raising the limit.
        vmem_limit = min(int(vmem_cap * 0.95), max(vmem_limit, resident + (8 << 20)))

    if two_cores and B >= 2 * _TILE_ALIGN:
        # 2 TensorCores (v7x): make the "parallel" grid >=2 and preferably even so neither
        # core idles on a tail step.  Single-TC chips (v5e/v6e) skip this — the grid is a
        # sequential loop there and splitting only adds per-step overhead.
        steps = max(2, pl.cdiv(B, tb))
        if steps % 2 == 1 and steps <= 16:
            steps += 1
        tb = min(tb, _round_up(pl.cdiv(B, steps), _TILE_ALIGN))

    grid = (pl.cdiv(B, tb),)

    # x / out tiled over the batch; every weight block and the concatenated bias block is the
    # full (padded) array, reused for every batch tile (constant index_map) and single-buffered.
    param_mode = pl.Buffered(1) if single_buffer_params else None
    in_specs = [pl.BlockSpec((tb, F), lambda i: (i, 0))]
    for w in params.w_bf:
        in_specs.append(pl.BlockSpec(w.shape, lambda i: (0, 0), pipeline_mode=param_mode))
    in_specs.append(pl.BlockSpec(params.bias_cat.shape, lambda i: (0, 0),
                                 pipeline_mode=param_mode))
    out_spec = pl.BlockSpec((tb, out_pad), lambda i: (i, 0))   # lane-dense (>=128) bf16 stores

    # Cost estimate on the padded shapes (consistent flops vs bytes).
    flops = 2 * B * sum(w.shape[0] * w.shape[1] for w in params.w_bf)
    bytes_accessed = (B * F * 2
                      + sum(w.size * 2 for w in params.w_bf)
                      + params.bias_cat.size * 4
                      + B * out_pad * 2)
    cost = pl.CostEstimate(flops=flops, transcendentals=0, bytes_accessed=bytes_accessed)

    kernel = functools.partial(_mlp_kernel, params.out_widths)

    out_padded = pl.pallas_call(
        kernel,
        out_shape=jax.ShapeDtypeStruct((B, out_pad), jnp.bfloat16),
        grid_spec=pltpu.PrefetchScalarGridSpec(
            num_scalar_prefetch=0,
            grid=grid,
            in_specs=in_specs,
            out_specs=out_spec,
        ),
        compiler_params=pltpu.CompilerParams(
            dimension_semantics=("parallel",),
            vmem_limit_bytes=vmem_limit,
        ),
        cost_estimate=cost,
    )(x_bf, *params.w_bf, params.bias_cat)

    return out_padded[:, :params.n_output].astype(x.dtype)


def init_params(key, n_feature, n_hidden, n_output):
    """Deterministic init mimicking nn.Linear's U(-1/sqrt(in), 1/sqrt(in))."""
    layers = [n_feature] + list(n_hidden) + [n_output]
    weights, biases = [], []
    for in_, out_ in zip(layers[:-1], layers[1:]):
        key, kw, kb = jax.random.split(key, 3)
        bound = 1.0 / jnp.sqrt(float(in_))
        # Stored as [in, out] (transposed from PyTorch's [out, in]).
        w = jax.random.uniform(kw, (in_, out_), jnp.float32, -bound, bound)
        b = jax.random.uniform(kb, (1, out_), jnp.float32, -bound, bound)
        weights.append(w)
        biases.append(b)
    return weights, biases


def reference_forward(x, weights, biases):
    h = x
    for i, (w, b) in enumerate(zip(weights, biases)):
        h = h @ w + b
        if i < len(weights) - 1:
            h = jnp.maximum(h, 0.0)
    return h


if __name__ == "__main__":
    key = jax.random.PRNGKey(0)

    # Small shapes consistent with MLP_revised(n_feature, n_hidden=[...], n_output=2)
    B = 8
    n_feature = 32
    n_hidden = [64, 32]
    n_output = 2

    key, kx = jax.random.split(key)
    x = jax.random.normal(kx, (B, n_feature), jnp.float32)
    weights, biases = init_params(key, n_feature, n_hidden, n_output)

    params = prepare_params(weights, biases)   # one-time prep, reused across forward calls
    try:
        out = mlp_revised_forward(x, params)
    except Exception:
        # Safety net: retry with default double-buffered parameter BlockSpecs in case this
        # jax/Mosaic version rejects pl.Buffered(1) on grid-invariant inputs.
        out = mlp_revised_forward(x, params, single_buffer_params=False)
    out = jax.block_until_ready(out)

    ref = reference_forward(x, weights, biases)  # f32 reference
    assert out.shape == (B, n_output)
    # bf16 MXU inputs + bf16 output store with f32 accumulation: ~1e-2 relative vs f32 ref.
    assert jnp.allclose(out, ref, atol=5e-2, rtol=5e-2), "mismatch vs reference"

    print("KERNEL_OK")
</pallas_src>

<mosaic_0001>
module attributes {stable_mosaic.version = 11 : i64} {
  func.func @_mlp_kernel(%arg0: i32, %arg1: memref<16x32xbf16, #tpu.memory_space<vmem>>, %arg2: memref<32x128xbf16, #tpu.memory_space<vmem>>, %arg3: memref<128x128xbf16, #tpu.memory_space<vmem>>, %arg4: memref<128x128xbf16, #tpu.memory_space<vmem>>, %arg5: memref<1x384xf32, #tpu.memory_space<vmem>>, %arg6: memref<16x128xbf16, #tpu.memory_space<vmem>>) attributes {dimension_semantics = [#tpu.dimension_semantics<parallel>], iteration_bounds = array<i64: 1>, scalar_prefetch = 0 : i64, scratch_operands = 0 : i64, tpu.core_type = #tpu.core_type<tc>, window_params = [{transform_indices = @transform_0, window_bounds = array<i64: 16, 32>}, {pipeline_mode = #tpu.pipeline_mode<synchronous>, transform_indices = @transform_1, window_bounds = array<i64: 32, 128>}, {pipeline_mode = #tpu.pipeline_mode<synchronous>, transform_indices = @transform_2, window_bounds = array<i64: 128, 128>}, {pipeline_mode = #tpu.pipeline_mode<synchronous>, transform_indices = @transform_3, window_bounds = array<i64: 128, 128>}, {pipeline_mode = #tpu.pipeline_mode<synchronous>, transform_indices = @transform_4, window_bounds = array<i64: 1, 384>}, {transform_indices = @transform_5, window_bounds = array<i64: 16, 128>}]} {
    %c0 = arith.constant 0 : index
    %c0_0 = arith.constant 0 : index
    %0 = vector.load %arg1[%c0, %c0_0] : memref<16x32xbf16, #tpu.memory_space<vmem>>, vector<16x32xbf16>
    %c0_1 = arith.constant 0 : index
    %c0_2 = arith.constant 0 : index
    %1 = vector.load %arg2[%c0_1, %c0_2] : memref<32x128xbf16, #tpu.memory_space<vmem>>, vector<32x128xbf16>
    %c0_3 = arith.constant 0 : index
    %c0_4 = arith.constant 0 : index
    %2 = vector.load %arg5[%c0_3, %c0_4] : memref<1x384xf32, #tpu.memory_space<vmem>>, vector<1x128xf32>
    %cst = arith.constant dense<0.000000e+00> : vector<16x128xf32>
    %3 = tpu.matmul %0, %1, %cst {dimension_numbers = #tpu.dot_dimension_numbers<[1], [0], [0], [1], [0, 0, 1, 1], [], []>} : vector<16x32xbf16>, vector<32x128xbf16>, vector<16x128xf32> -> vector<16x128xf32>
    %4 = vector.broadcast %2 : vector<1x128xf32> to vector<16x128xf32>
    %5 = arith.addf %3, %4 : vector<16x128xf32>
    %cst_5 = arith.constant 0.000000e+00 : f32
    %6 = vector.broadcast %cst_5 : f32 to vector<16x128xf32>
    %7 = arith.maximumf %5, %6 : vector<16x128xf32>
    %8 = arith.truncf %7 : vector<16x128xf32> to vector<16x128xbf16>
    %c0_6 = arith.constant 0 : index
    %c0_7 = arith.constant 0 : index
    %9 = vector.load %arg3[%c0_6, %c0_7] : memref<128x128xbf16, #tpu.memory_space<vmem>>, vector<128x128xbf16>
    %c0_8 = arith.constant 0 : index
    %c128 = arith.constant 128 : index
    %10 = vector.load %arg5[%c0_8, %c128] : memref<1x384xf32, #tpu.memory_space<vmem>>, vector<1x128xf32>
    %cst_9 = arith.constant dense<0.000000e+00> : vector<16x128xf32>
    %11 = tpu.matmul %8, %9, %cst_9 {dimension_numbers = #tpu.dot_dimension_numbers<[1], [0], [0], [1], [0, 0, 1, 1], [], []>} : vector<16x128xbf16>, vector<128x128xbf16>, vector<16x128xf32> -> vector<16x128xf32>
    %12 = vector.broadcast %10 : vector<1x128xf32> to vector<16x128xf32>
    %13 = arith.addf %11, %12 : vector<16x128xf32>
    %cst_10 = arith.constant 0.000000e+00 : f32
    %14 = vector.broadcast %cst_10 : f32 to vector<16x128xf32>
    %15 = arith.maximumf %13, %14 : vector<16x128xf32>
    %16 = arith.truncf %15 : vector<16x128xf32> to vector<16x128xbf16>
    %c0_11 = arith.constant 0 : index
    %c0_12 = arith.constant 0 : index
    %17 = vector.load %arg4[%c0_11, %c0_12] : memref<128x128xbf16, #tpu.memory_space<vmem>>, vector<128x128xbf16>
    %c0_13 = arith.constant 0 : index
    %c256 = arith.constant 256 : index
    %18 = vector.load %arg5[%c0_13, %c256] : memref<1x384xf32, #tpu.memory_space<vmem>>, vector<1x128xf32>
    %cst_14 = arith.constant dense<0.000000e+00> : vector<16x128xf32>
    %19 = tpu.matmul %16, %17, %cst_14 {dimension_numbers = #tpu.dot_dimension_numbers<[1], [0], [0], [1], [0, 0, 1, 1], [], []>} : vector<16x128xbf16>, vector<128x128xbf16>, vector<16x128xf32> -> vector<16x128xf32>
    %20 = vector.broadcast %18 : vector<1x128xf32> to vector<16x128xf32>
    %21 = arith.addf %19, %20 : vector<16x128xf32>
    %22 = arith.truncf %21 : vector<16x128xf32> to vector<16x128xbf16>
    %c0_15 = arith.constant 0 : index
    %c0_16 = arith.constant 0 : index
    %23 = vector.load %arg6[%c0_15, %c0_16] : memref<16x128xbf16, #tpu.memory_space<vmem>>, vector<16x128xbf16>
    tpu.vector_store %arg6[%c0_15, %c0_16], %22 {strides = array<i32>} : memref<16x128xbf16, #tpu.memory_space<vmem>>, vector<16x128xbf16>,
    return
  }
  func.func @transform_0(%arg0: i32) -> (i32, i32) {
    %c0_i32 = arith.constant 0 : i32
    %c0_i32_0 = arith.constant 0 : i32
    return %arg0, %c0_i32 : i32, i32
  }
  func.func @transform_1(%arg0: i32) -> (i32, i32) {
    %c0_i32 = arith.constant 0 : i32
    %c0_i32_0 = arith.constant 0 : i32
    %c0_i32_1 = arith.constant 0 : i32
    return %c0_i32, %c0_i32_0 : i32, i32
  }
  func.func @transform_2(%arg0: i32) -> (i32, i32) {
    %c0_i32 = arith.constant 0 : i32
    %c0_i32_0 = arith.constant 0 : i32
    %c0_i32_1 = arith.constant 0 : i32
    return %c0_i32, %c0_i32_0 : i32, i32
  }
  func.func @transform_3(%arg0: i32) -> (i32, i32) {
    %c0_i32 = arith.constant 0 : i32
    %c0_i32_0 = arith.constant 0 : i32
    %c0_i32_1 = arith.constant 0 : i32
    return %c0_i32, %c0_i32_0 : i32, i32
  }
  func.func @transform_4(%arg0: i32) -> (i32, i32) {
    %c0_i32 = arith.constant 0 : i32
    %c0_i32_0 = arith.constant 0 : i32
    %c0_i32_1 = arith.constant 0 : i32
    return %c0_i32, %c0_i32_0 : i32, i32
  }
  func.func @transform_5(%arg0: i32) -> (i32, i32) {
    %c0_i32 = arith.constant 0 : i32
    %c0_i32_0 = arith.constant 0 : i32
    return %arg0, %c0_i32 : i32, i32
  }
}

module attributes {stable_mosaic.version = 11 : i64} {
  func.func @_mlp_kernel(%arg0: i32, %arg1: memref<16x32xbf16, #tpu.memory_space<vmem>>, %arg2: memref<32x128xbf16, #tpu.memory_space<vmem>>, %arg3: memref<128x128xbf16, #tpu.memory_space<vmem>>, %arg4: memref<128x128xbf16, #tpu.memory_space<vmem>>, %arg5: memref<1x384xf32, #tpu.memory_space<vmem>>, %arg6: memref<16x128xbf16, #tpu.memory_space<vmem>>) attributes {dimension_semantics = [#tpu.dimension_semantics<parallel>], iteration_bounds = array<i64: 1>, scalar_prefetch = 0 : i64, scratch_operands = 0 : i64, tpu.core_type = #tpu.core_type<tc>, window_params = [{transform_indices = @transform_0, window_bounds = array<i64: 16, 32>}, {pipeline_mode = #tpu.pipeline_mode<synchronous>, transform_indices = @transform_1, window_bounds = array<i64: 32, 128>}, {pipeline_mode = #tpu.pipeline_mode<synchronous>, transform_indices = @transform_2, window_bounds = array<i64: 128, 128>}, {pipeline_mode = #tpu.pipeline_mode<synchronous>, transform_indices = @transform_3, window_bounds = array<i64: 128, 128>}, {pipeline_mode = #tpu.pipeline_mode<synchronous>, transform_indices = @transform_4, window_bounds = array<i64: 1, 384>}, {transform_indices = @transform_5, window_bounds = array<i64: 16, 128>}]} {
    %c0 = arith.constant 0 : index
    %c0_0 = arith.constant 0 : index
    %0 = vector.load %arg1[%c0, %c0_0] : memref<16x32xbf16, #tpu.memory_space<vmem>>, vector<16x32xbf16>
    %c0_1 = arith.constant 0 : index
    %c0_2 = arith.constant 0 : index
    %1 = vector.load %arg2[%c0_1, %c0_2] : memref<32x128xbf16, #tpu.memory_space<vmem>>, vector<32x128xbf16>
    %c0_3 = arith.constant 0 : index
    %c0_4 = arith.constant 0 : index
    %2 = vector.load %arg5[%c0_3, %c0_4] : memref<1x384xf32, #tpu.memory_space<vmem>>, vector<1x128xf32>
    %cst = arith.constant dense<0.000000e+00> : vector<16x128xf32>
    %3 = tpu.matmul %0, %1, %cst {dimension_numbers = #tpu.dot_dimension_numbers<[1], [0], [0], [1], [0, 0, 1, 1], [], []>} : vector<16x32xbf16>, vector<32x128xbf16>, vector<16x128xf32> -> vector<16x128xf32>
    %4 = vector.broadcast %2 : vector<1x128xf32> to vector<16x128xf32>
    %5 = arith.addf %3, %4 : vector<16x128xf32>
    %cst_5 = arith.constant 0.000000e+00 : f32
    %6 = vector.broadcast %cst_5 : f32 to vector<16x128xf32>
    %7 = arith.maximumf %5, %6 : vector<16x128xf32>
    %8 = arith.truncf %7 : vector<16x128xf32> to vector<16x128xbf16>
    %c0_6 = arith.constant 0 : index
    %c0_7 = arith.constant 0 : index
    %9 = vector.load %arg3[%c0_6, %c0_7] : memref<128x128xbf16, #tpu.memory_space<vmem>>, vector<128x128xbf16>
    %c0_8 = arith.constant 0 : index
    %c128 = arith.constant 128 : index
    %10 = vector.load %arg5[%c0_8, %c128] : memref<1x384xf32, #tpu.memory_space<vmem>>, vector<1x128xf32>
    %cst_9 = arith.constant dense<0.000000e+00> : vector<16x128xf32>
    %11 = tpu.matmul %8, %9, %cst_9 {dimension_numbers = #tpu.dot_dimension_numbers<[1], [0], [0], [1], [0, 0, 1, 1], [], []>} : vector<16x128xbf16>, vector<128x128xbf16>, vector<16x128xf32> -> vector<16x128xf32>
    %12 = vector.broadcast %10 : vector<1x128xf32> to vector<16x128xf32>
    %13 = arith.addf %11, %12 : vector<16x128xf32>
    %cst_10 = arith.constant 0.000000e+00 : f32
    %14 = vector.broadcast %cst_10 : f32 to vector<16x128xf32>
    %15 = arith.maximumf %13, %14 : vector<16x128xf32>
    %16 = arith.truncf %15 : vector<16x128xf32> to vector<16x128xbf16>
    %c0_11 = arith.constant 0 : index
    %c0_12 = arith.constant 0 : index
    %17 = vector.load %arg4[%c0_11, %c0_12] : memref<128x128xbf16, #tpu.memory_space<vmem>>, vector<128x128xbf16>
    %c0_13 = arith.constant 0 : index
    %c256 = arith.constant 256 : index
    %18 = vector.load %arg5[%c0_13, %c256] : memref<1x384xf32, #tpu.memory_space<vmem>>, vector<1x128xf32>
    %cst_14 = arith.constant dense<0.000000e+00> : vector<16x128xf32>
    %19 = tpu.matmul %16, %17, %cst_14 {dimension_numbers = #tpu.dot_dimension_numbers<[1], [0], [0], [1], [0, 0, 1, 1], [], []>} : vector<16x128xbf16>, vector<128x128xbf16>, vector<16x128xf32> -> vector<16x128xf32>
    %20 = vector.broadcast %18 : vector<1x128xf32> to vector<16x128xf32>
    %21 = arith.addf %19, %20 : vector<16x128xf32>
    %22 = arith.truncf %21 : vector<16x128xf32> to vector<16x128xbf16>
    %c0_15 = arith.constant 0 : index
    %c0_16 = arith.constant 0 : index
    %23 = vector.load %arg6[%c0_15, %c0_16] : memref<16x128xbf16, #tpu.memory_space<vmem>>, vector<16x128xbf16>
    tpu.vector_store %arg6[%c0_15, %c0_16], %22 {strides = array<i32>} : memref<16x128xbf16, #tpu.memory_space<vmem>>, vector<16x128xbf16>,
    return
  }
  func.func @transform_0(%arg0: i32) -> (i32, i32) {
    %c0_i32 = arith.constant 0 : i32
    %c0_i32_0 = arith.constant 0 : i32
    return %arg0, %c0_i32 : i32, i32
  }
  func.func @transform_1(%arg0: i32) -> (i32, i32) {
    %c0_i32 = arith.constant 0 : i32
    %c0_i32_0 = arith.constant 0 : i32
    %c0_i32_1 = arith.constant 0 : i32
    return %c0_i32, %c0_i32_0 : i32, i32
  }
  func.func @transform_2(%arg0: i32) -> (i32, i32) {
    %c0_i32 = arith.constant 0 : i32
    %c0_i32_0 = arith.constant 0 : i32
    %c0_i32_1 = arith.constant 0 : i32
    return %c0_i32, %c0_i32_0 : i32, i32
  }
  func.func @transform_3(%arg0: i32) -> (i32, i32) {
    %c0_i32 = arith.constant 0 : i32
    %c0_i32_0 = arith.constant 0 : i32
    %c0_i32_1 = arith.constant 0 : i32
    return %c0_i32, %c0_i32_0 : i32, i32
  }
  func.func @transform_4(%arg0: i32) -> (i32, i32) {
    %c0_i32 = arith.constant 0 : i32
    %c0_i32_0 = arith.constant 0 : i32
    %c0_i32_1 = arith.constant 0 : i32
    return %c0_i32, %c0_i32_0 : i32, i32
  }
  func.func @transform_5(%arg0: i32) -> (i32, i32) {
    %c0_i32 = arith.constant 0 : i32
    %c0_i32_0 = arith.constant 0 : i32
    return %arg0, %c0_i32 : i32, i32
  }
}

</mosaic_0001>

<llo_original>
// kernel: tpu_custom_call.1
$region0: #{tpu_custom_call.1}
  #allocation0 [shape = 'u32[]', space=smem, size = 0x4, offset = 0x4, fixed_abs, tag = 'smem constant byte address 0x4 - core index']
  #allocation1 [shape = 'u32[144,128]{1,0:T(1,128)}', space=vmem, size = 0x12000, scoped, tag = 'internal scratch']
  %s0 = inlined_call_operand.hbm [shape: bf16[8,32], index: 0, kind: input, shape index: {}]
  %s1 = inlined_call_operand.hbm [shape: bf16[32,128], index: 1, kind: input, shape index: {}]
  %s2 = inlined_call_operand.hbm [shape: bf16[128,128], index: 2, kind: input, shape index: {}]
  %s3 = inlined_call_operand.hbm [shape: bf16[128,128], index: 3, kind: input, shape index: {}]
  %s4 = inlined_call_operand.vmem [shape: f32[1,384], index: 4, kind: input, shape index: {}]
  %s5 = inlined_call_operand.hbm [shape: bf16[8,128], index: 5, kind: output, shape index: {}]
  %s6 = sld [smem:[#allocation0]]
  $region46: #{tpu_custom_call.1} parent=0
    _
  %s8 = ssub.s32 1, %s6
  %s9 = scalar_select 0, %s8, %s6
  $region1: #{tpu_custom_call.1} parent=0
    #allocation2 [shape = 'u8[4096]{0}', space=vmem, size = 0x1000, scoped, tag = 'input window, operand 0, single buffered']
    #allocation3 [shape = 's32[1]{0}', space=sflag, size = 0x4, scoped, tag = 'scoped memory for tpu_custom_call.1']
    #allocation4 [shape = 's32[1]{0}', space=sflag, size = 0x4, scoped, tag = 'scoped memory for tpu_custom_call.1']
    #allocation5 [shape = 'u8[8192]{0}', space=vmem, size = 0x2000, scoped, tag = 'input window, operand 1, single buffered']
    #allocation6 [shape = 's32[1]{0}', space=sflag, size = 0x4, scoped, tag = 'scoped memory for tpu_custom_call.1']
    #allocation7 [shape = 'u8[32768]{0}', space=vmem, size = 0x8000, scoped, tag = 'input window, operand 2, single buffered']
    #allocation8 [shape = 'u8[32768]{0}', space=vmem, size = 0x8000, scoped, tag = 'input window, operand 3, single buffered']
    #allocation9 [shape = 's32[1]{0}', space=sflag, size = 0x4, scoped, tag = 'scoped memory for tpu_custom_call.1']
    #allocation10 [shape = 'u8[4096]{0}', space=vmem, size = 0x1000, scoped, tag = 'output window, operand 0, single buffered']
    %10 = vsyncpa [#allocation3], 0
    %11 = vsyncpa [#allocation6], 0
    %12 = vsyncpa [#allocation9], 0
    %13 = vsyncpa [#allocation4], 0
    // Predicated region
    $region2: #{tpu_custom_call.1} parent=1 // pred_check
      _
    $region3: #{tpu_custom_call.1} parent=1 // pred_check_branch
      %15 = sbr.rel (0) target = $region5
    $region4: #{tpu_custom_call.1} parent=1 // pred_region
      %s17 = ssub.s32 128, 64
      %18 = vsyncadd [#allocation3], %s17
      %s19 = sshll.u32 [#allocation2], 4
      %s20 = int_to_ptr.vmem [resolvable:$true] %s19
      %25 = dma.hbm_to_vmem [thread:$0]  %s0, 64, %s20, [#allocation3], 64, 64, 4
    $region5: #{tpu_custom_call.1} parent=1 // pred_fallthru
      _
    // Predicated region
    $region6: #{tpu_custom_call.1} parent=1 // pred_check
      _
    $region7: #{tpu_custom_call.1} parent=1 // pred_check_branch
      %27 = sbr.rel (0) target = $region9
    $region8: #{tpu_custom_call.1} parent=1 // pred_region
      %s29 = ssub.s32 256, 256
      %30 = vsyncadd [#allocation6], %s29
      %s31 = sshll.u32 [#allocation5], 4
      %s32 = int_to_ptr.vmem [resolvable:$true] %s31
      %37 = dma.hbm_to_vmem [thread:$0]  %s1, 256, %s32, [#allocation6], 64, 64, 4
    $region9: #{tpu_custom_call.1} parent=1 // pred_fallthru
      _
    // Predicated region
    $region10: #{tpu_custom_call.1} parent=1 // pred_check
      _
    $region11: #{tpu_custom_call.1} parent=1 // pred_check_branch
      %39 = sbr.rel (0) target = $region13
    $region12: #{tpu_custom_call.1} parent=1 // pred_region
      %s41 = ssub.s32 1024, 1024
      %42 = vsyncadd [#allocation6], %s41
      %s43 = sshll.u32 [#allocation7], 4
      %s44 = int_to_ptr.vmem [resolvable:$true] %s43
      %49 = dma.hbm_to_vmem [thread:$0]  %s2, 1024, %s44, [#allocation6], 64, 64, 4
    $region13: #{tpu_custom_call.1} parent=1 // pred_fallthru
      _
    // Predicated region
    $region14: #{tpu_custom_call.1} parent=1 // pred_check
      _
    $region15: #{tpu_custom_call.1} parent=1 // pred_check_branch
      %51 = sbr.rel (0) target = $region17
    $region16: #{tpu_custom_call.1} parent=1 // pred_region
      %s53 = ssub.s32 1024, 1024
      %54 = vsyncadd [#allocation9], %s53
      %s55 = sshll.u32 [#allocation8], 4
      %s56 = int_to_ptr.vmem [resolvable:$true] %s55
      %61 = dma.hbm_to_vmem [thread:$0]  %s3, 1024, %s56, [#allocation9], 64, 64, 4
    $region17: #{tpu_custom_call.1} parent=1 // pred_fallthru
      _
    // Predicated region
    $region18: #{tpu_custom_call.1} parent=1 // pred_check
      _
    $region19: #{tpu_custom_call.1} parent=1 // pred_check_branch
      %63 = sbr.rel (0) target = $region21
    $region20: #{tpu_custom_call.1} parent=1 // pred_region
      _
    $region21: #{tpu_custom_call.1} parent=1 // pred_fallthru
      _
    // Predicated region
    $region22: #{tpu_custom_call.1} parent=1 // pred_check
      _
    $region23: #{tpu_custom_call.1} parent=1 // pred_check_branch
      %65 = sbr.rel (0) target = $region25
    $region24: #{tpu_custom_call.1} parent=1 // pred_region
      %66 = dma.done [#allocation3], 128
    $region25: #{tpu_custom_call.1} parent=1 // pred_fallthru
      _
    // Predicated region
    $region26: #{tpu_custom_call.1} parent=1 // pred_check
      _
    $region27: #{tpu_custom_call.1} parent=1 // pred_check_branch
      %68 = sbr.rel (0) target = $region29
    $region28: #{tpu_custom_call.1} parent=1 // pred_region
      %69 = dma.done [#allocation6], 256
    $region29: #{tpu_custom_call.1} parent=1 // pred_fallthru
      _
    // Predicated region
    $region30: #{tpu_custom_call.1} parent=1 // pred_check
      _
    $region31: #{tpu_custom_call.1} parent=1 // pred_check_branch
      %71 = sbr.rel (0) target = $region33
    $region32: #{tpu_custom_call.1} parent=1 // pred_region
      %72 = dma.done [#allocation6], 1024
    $region33: #{tpu_custom_call.1} parent=1 // pred_fallthru
      _
    // Predicated region
    $region34: #{tpu_custom_call.1} parent=1 // pred_check
      _
    $region35: #{tpu_custom_call.1} parent=1 // pred_check_branch
      %74 = sbr.rel (0) target = $region37
    $region36: #{tpu_custom_call.1} parent=1 // pred_region
      %75 = dma.done [#allocation9], 1024
    $region37: #{tpu_custom_call.1} parent=1 // pred_fallthru
      _
    %v77 = vld [vmem:[#allocation2] sm:$0xf]
    %v78 = vld [vmem:[#allocation2 + $0x4] sm:$0xf]
    %v79 = vld [vmem:[#allocation5] sm:$0xf]
    %v80 = vld [vmem:[#allocation5 + $0x4] sm:$0xf]
    %v81 = vld [vmem:[#allocation5 + $0x8] sm:$0xf]
    %v82 = vld [vmem:[#allocation5 + $0xc] sm:$0xf]
    %v83 = vld [vmem:[%s4] sm:$0x1]
    %v85 = vlaneseq
    %v86 = vshrl.u32 %v85, 7
    %v87 = vsub.s32 0, %v86
    %v88 = vrot.slane %v83, %v87
    %v92 = vunpack.c.l.b16 %v77
    %v93 = vunpack.c.l.b16 %v78
    %v94 = vpack.c.b16 %v93, %v92
    %v99 = vunpack.c.l.b16 %v79
    %v100 = vunpack.c.l.b16 %v80
    %v101 = vunpack.c.l.b16 %v81
    %v102 = vunpack.c.l.b16 %v82
    %v103 = vpack.c.b16 %v100, %v99
    %v104 = vpack.c.b16 %v102, %v101
    %vm107 = vcmask 261120
    %v109 = vsel %vm107, %v94, 0
    %111 = vmatprep.subr.bf16.mxu0 0
    %112 = vmatpush1.bf16.msra.mxu0 0
    %113 = vmatprep.subr.bf16.mxu0 0
    %114 = vmatpush1.bf16.msra.mxu0 0
    %115 = vmatprep.subr.bf16.mxu0 0
    %116 = vmatpush1.bf16.msra.mxu0 0
    %117 = vmatprep.subr.bf16.mxu0 0
    %118 = vmatpush1.bf16.msra.mxu0 0
    %119 = vmatprep.subr.bf16.mxu0 0
    %120 = vmatpush1.bf16.msra.mxu0 0
    %121 = vmatprep.subr.bf16.mxu0 0
    %122 = vmatpush1.bf16.msra.mxu0 0
    %123 = vmatprep.subr.bf16.mxu0 0
    %124 = vmatpush1.bf16.msra.mxu0 %v104
    %125 = vmatprep.subr.bf16.mxu0 0
    %126 = vmatpush1.bf16.msra.mxu0 %v103
    %127 = vmatprep.subr.bf16.mxu0 0
    %128 = vmatpush2.bf16.msra.mxu0 0
    %129 = vmatprep.subr.bf16.mxu0 0
    %130 = vmatpush2.bf16.msra.mxu0 0
    %131 = vmatprep.subr.bf16.mxu0 0
    %132 = vmatpush2.bf16.msra.mxu0 0
    %133 = vmatprep.subr.bf16.mxu0 0
    %134 = vmatpush2.bf16.msra.mxu0 0
    %135 = vmatprep.subr.bf16.mxu0 0
    %136 = vmatpush2.bf16.msra.mxu0 0
    %137 = vmatprep.subr.bf16.mxu0 0
    %138 = vmatpush2.bf16.msra.mxu0 0
    %139 = vmatprep.subr.bf16.mxu0 0
    %140 = vmatpush2.bf16.msra.mxu0 0
    %141 = vmatprep.subr.bf16.mxu0 0
    %142 = vmatpush2.bf16.msra.mxu0 0
    %143 = vmatprep.mubr.bf16.mxu0 0
    %144 = vmatmul.mubr.bf16.gmra.mxu0 %v109
    %v145 = vpop.f32.mrf.mxu0
    %v146 = vadd.f32 %v88, %v145
    %v147 = vpop.f32.mrf.mxu0
    %v148 = vpop.f32.mrf.mxu0
    %v149 = vadd.f32 %v88, %v148
    %v150 = vpop.f32.mrf.mxu0
    %151 = vdwg.mxu0
    %v152 = vmax.f32 %v146, 0.0
    %v153 = vmax.f32 %v149, 0.0
    %v154 = vpack.c.bf16 %v153, %v152
    %v155 = vld [vmem:[#allocation7] sm:$0xf]
    %v156 = vld [vmem:[#allocation7 + $0x4] sm:$0xf]
    %v157 = vld [vmem:[#allocation7 + $0x8] sm:$0xf]
    %v158 = vld [vmem:[#allocation7 + $0xc] sm:$0xf]
    %v159 = vld [vmem:[#allocation7 + $0x10] sm:$0xf]
    %v160 = vld [vmem:[#allocation7 + $0x14] sm:$0xf]
    %v161 = vld [vmem:[#allocation7 + $0x18] sm:$0xf]
    %v162 = vld [vmem:[#allocation7 + $0x1c] sm:$0xf]
    %v163 = vld [vmem:[#allocation7 + $0x20] sm:$0xf]
    %v164 = vld [vmem:[#allocation7 + $0x24] sm:$0xf]
    %v165 = vld [vmem:[#allocation7 + $0x28] sm:$0xf]
    %v166 = vld [vmem:[#allocation7 + $0x2c] sm:$0xf]
    %v167 = vld [vmem:[#allocation7 + $0x30] sm:$0xf]
    %v168 = vld [vmem:[#allocation7 + $0x34] sm:$0xf]
    %v169 = vld [vmem:[#allocation7 + $0x38] sm:$0xf]
    %v170 = vld [vmem:[#allocation7 + $0x3c] sm:$0xf]
    %v171 = vld [vmem:[%s4 + $0x1] sm:$0x1]
    %v173 = vlaneseq
    %v174 = vshrl.u32 %v173, 7
    %v175 = vsub.s32 0, %v174
    %v176 = vrot.slane %v171, %v175
    %v194 = vunpack.c.l.b16 %v155
    %v195 = vunpack.c.l.b16 %v156
    %v196 = vunpack.c.l.b16 %v157
    %v197 = vunpack.c.l.b16 %v158
    %v198 = vunpack.c.l.b16 %v159
    %v199 = vunpack.c.l.b16 %v160
    %v200 = vunpack.c.l.b16 %v161
    %v201 = vunpack.c.l.b16 %v162
    %v202 = vunpack.c.l.b16 %v163
    %v203 = vunpack.c.l.b16 %v164
    %v204 = vunpack.c.l.b16 %v165
    %v205 = vunpack.c.l.b16 %v166
    %v206 = vunpack.c.l.b16 %v167
    %v207 = vunpack.c.l.b16 %v168
    %v208 = vunpack.c.l.b16 %v169
    %v209 = vunpack.c.l.b16 %v170
    %v210 = vpack.c.b16 %v195, %v194
    %v211 = vpack.c.b16 %v197, %v196
    %v212 = vpack.c.b16 %v199, %v198
    %v213 = vpack.c.b16 %v201, %v200
    %v214 = vpack.c.b16 %v203, %v202
    %v215 = vpack.c.b16 %v205, %v204
    %v216 = vpack.c.b16 %v207, %v206
    %v217 = vpack.c.b16 %v209, %v208
    %226 = vmatprep.subr.bf16.mxu0 0
    %227 = vmatpush1.bf16.msra.mxu0 %v217
    %228 = vmatprep.subr.bf16.mxu0 0
    %229 = vmatpush1.bf16.msra.mxu0 %v216
    %230 = vmatprep.subr.bf16.mxu0 0
    %231 = vmatpush1.bf16.msra.mxu0 %v215
    %232 = vmatprep.subr.bf16.mxu0 0
    %233 = vmatpush1.bf16.msra.mxu0 %v214
    %234 = vmatprep.subr.bf16.mxu0 0
    %235 = vmatpush1.bf16.msra.mxu0 %v213
    %236 = vmatprep.subr.bf16.mxu0 0
    %237 = vmatpush1.bf16.msra.mxu0 %v212
    %238 = vmatprep.subr.bf16.mxu0 0
    %239 = vmatpush1.bf16.msra.mxu0 %v211
    %240 = vmatprep.subr.bf16.mxu0 0
    %241 = vmatpush1.bf16.msra.mxu0 %v210
    %242 = vmatprep.subr.bf16.mxu0 0
    %243 = vmatpush2.bf16.msra.mxu0 0
    %244 = vmatprep.subr.bf16.mxu0 0
    %245 = vmatpush2.bf16.msra.mxu0 0
    %246 = vmatprep.subr.bf16.mxu0 0
    %247 = vmatpush2.bf16.msra.mxu0 0
    %248 = vmatprep.subr.bf16.mxu0 0
    %249 = vmatpush2.bf16.msra.mxu0 0
    %250 = vmatprep.subr.bf16.mxu0 0
    %251 = vmatpush2.bf16.msra.mxu0 0
    %252 = vmatprep.subr.bf16.mxu0 0
    %253 = vmatpush2.bf16.msra.mxu0 0
    %254 = vmatprep.subr.bf16.mxu0 0
    %255 = vmatpush2.bf16.msra.mxu0 0
    %256 = vmatprep.subr.bf16.mxu0 0
    %257 = vmatpush2.bf16.msra.mxu0 0
    %258 = vmatprep.mubr.bf16.mxu0 0
    %259 = vmatmul.mubr.bf16.gmra.mxu0 %v154
    %v260 = vpop.f32.mrf.mxu0
    %v261 = vadd.f32 %v176, %v260
    %v262 = vpop.f32.mrf.mxu0
    %v263 = vpop.f32.mrf.mxu0
    %v264 = vadd.f32 %v176, %v263
    %v265 = vpop.f32.mrf.mxu0
    %266 = vdwg.mxu0
    %v267 = vmax.f32 %v261, 0.0
    %v268 = vmax.f32 %v264, 0.0
    %v269 = vpack.c.bf16 %v268, %v267
    %v270 = vld [vmem:[#allocation8] sm:$0xf]
    %v271 = vld [vmem:[#allocation8 + $0x4] sm:$0xf]
    %v272 = vld [vmem:[#allocation8 + $0x8] sm:$0xf]
    %v273 = vld [vmem:[#allocation8 + $0xc] sm:$0xf]
    %v274 = vld [vmem:[#allocation8 + $0x10] sm:$0xf]
    %v275 = vld [vmem:[#allocation8 + $0x14] sm:$0xf]
    %v276 = vld [vmem:[#allocation8 + $0x18] sm:$0xf]
    %v277 = vld [vmem:[#allocation8 + $0x1c] sm:$0xf]
    %v278 = vld [vmem:[#allocation8 + $0x20] sm:$0xf]
    %v279 = vld [vmem:[#allocation8 + $0x24] sm:$0xf]
    %v280 = vld [vmem:[#allocation8 + $0x28] sm:$0xf]
    %v281 = vld [vmem:[#allocation8 + $0x2c] sm:$0xf]
    %v282 = vld [vmem:[#allocation8 + $0x30] sm:$0xf]
    %v283 = vld [vmem:[#allocation8 + $0x34] sm:$0xf]
    %v284 = vld [vmem:[#allocation8 + $0x38] sm:$0xf]
    %v285 = vld [vmem:[#allocation8 + $0x3c] sm:$0xf]
    %v286 = vld [vmem:[%s4 + $0x2] sm:$0x1]
    %v288 = vlaneseq
    %v289 = vshrl.u32 %v288, 7
    %v290 = vsub.s32 0, %v289
    %v291 = vrot.slane %v286, %v290
    %v309 = vunpack.c.l.b16 %v270
    %v310 = vunpack.c.l.b16 %v271
    %v311 = vunpack.c.l.b16 %v272
    %v312 = vunpack.c.l.b16 %v273
    %v313 = vunpack.c.l.b16 %v274
    %v314 = vunpack.c.l.b16 %v275
    %v315 = vunpack.c.l.b16 %v276
    %v316 = vunpack.c.l.b16 %v277
    %v317 = vunpack.c.l.b16 %v278
    %v318 = vunpack.c.l.b16 %v279
    %v319 = vunpack.c.l.b16 %v280
    %v320 = vunpack.c.l.b16 %v281
    %v321 = vunpack.c.l.b16 %v282
    %v322 = vunpack.c.l.b16 %v283
    %v323 = vunpack.c.l.b16 %v284
    %v324 = vunpack.c.l.b16 %v285
    %v325 = vpack.c.b16 %v310, %v309
    %v326 = vpack.c.b16 %v312, %v311
    %v327 = vpack.c.b16 %v314, %v313
    %v328 = vpack.c.b16 %v316, %v315
    %v329 = vpack.c.b16 %v318, %v317
    %v330 = vpack.c.b16 %v320, %v319
    %v331 = vpack.c.b16 %v322, %v321
    %v332 = vpack.c.b16 %v324, %v323
    %341 = vmatprep.subr.bf16.mxu0 0
    %342 = vmatpush1.bf16.msra.mxu0 %v332
    %343 = vmatprep.subr.bf16.mxu0 0
    %344 = vmatpush1.bf16.msra.mxu0 %v331
    %345 = vmatprep.subr.bf16.mxu0 0
    %346 = vmatpush1.bf16.msra.mxu0 %v330
    %347 = vmatprep.subr.bf16.mxu0 0
    %348 = vmatpush1.bf16.msra.mxu0 %v329
    %349 = vmatprep.subr.bf16.mxu0 0
    %350 = vmatpush1.bf16.msra.mxu0 %v328
    %351 = vmatprep.subr.bf16.mxu0 0
    %352 = vmatpush1.bf16.msra.mxu0 %v327
    %353 = vmatprep.subr.bf16.mxu0 0
    %354 = vmatpush1.bf16.msra.mxu0 %v326
    %355 = vmatprep.subr.bf16.mxu0 0
    %356 = vmatpush1.bf16.msra.mxu0 %v325
    %357 = vmatprep.subr.bf16.mxu0 0
    %358 = vmatpush2.bf16.msra.mxu0 0
    %359 = vmatprep.subr.bf16.mxu0 0
    %360 = vmatpush2.bf16.msra.mxu0 0
    %361 = vmatprep.subr.bf16.mxu0 0
    %362 = vmatpush2.bf16.msra.mxu0 0
    %363 = vmatprep.subr.bf16.mxu0 0
    %364 = vmatpush2.bf16.msra.mxu0 0
    %365 = vmatprep.subr.bf16.mxu0 0
    %366 = vmatpush2.bf16.msra.mxu0 0
    %367 = vmatprep.subr.bf16.mxu0 0
    %368 = vmatpush2.bf16.msra.mxu0 0
    %369 = vmatprep.subr.bf16.mxu0 0
    %370 = vmatpush2.bf16.msra.mxu0 0
    %371 = vmatprep.subr.bf16.mxu0 0
    %372 = vmatpush2.bf16.msra.mxu0 0
    %373 = vmatprep.mubr.bf16.mxu0 0
    %374 = vmatmul.mubr.bf16.gmra.mxu0 %v269
    %v375 = vpop.f32.mrf.mxu0
    %v376 = vadd.f32 %v291, %v375
    %v377 = vpop.f32.mrf.mxu0
    %v378 = vpop.f32.mrf.mxu0
    %v379 = vadd.f32 %v291, %v378
    %v380 = vpop.f32.mrf.mxu0
    %381 = vdwg.mxu0
    %v382 = vpack.c.bf16 %v379, %v376
    %v384 = vunpack.c.l.b16 %v382
    %v385 = vunpack.c.h.b16 %v382
    %v386 = vpack.c.b16 %v384, %v384
    %v387 = vpack.c.b16 %v385, %v385
    %390 = vst [vmem:[#allocation10] sm:$0xf] %v386
    %391 = vst [vmem:[#allocation10 + $0x4] sm:$0xf] %v387
    // Predicated region
    $region38: #{tpu_custom_call.1} parent=1 // pred_check
      _
    $region39: #{tpu_custom_call.1} parent=1 // pred_check_branch
      %393 = sbr.rel (0) target = $region41
    $region40: #{tpu_custom_call.1} parent=1 // pred_region
      %s395 = ssub.s32 128, 64
      %396 = vsyncadd [#allocation4], %s395
      %s397 = sshll.u32 [#allocation10], 4
      %s398 = int_to_ptr.vmem [resolvable:$true] %s397
      %403 = dma.vmem_to_hbm [thread:$0]  %s398, 64, %s5, [#allocation4], 64, 64, 4
    $region41: #{tpu_custom_call.1} parent=1 // pred_fallthru
      _
    // Predicated region
    $region42: #{tpu_custom_call.1} parent=1 // pred_check
      _
    $region43: #{tpu_custom_call.1} parent=1 // pred_check_branch
      %405 = sbr.rel (0) target = $region45
    $region44: #{tpu_custom_call.1} parent=1 // pred_region
      %406 = dma.done [#allocation4], 128
    $region45: #{tpu_custom_call.1} parent=1 // pred_fallthru
      _
    %407 = vsyncpa [#allocation3], 1
    %408 = vsyncpa [#allocation6], 1
    %409 = vsyncpa [#allocation9], 1
    %410 = vsyncpa [#allocation4], 1

// kernel: tpu_custom_call.1
$region0: #{tpu_custom_call.1}
  #allocation0 [shape = 'u32[]', space=smem, size = 0x4, offset = 0x4, fixed_abs, tag = 'smem constant byte address 0x4 - core index']
  #allocation1 [shape = 'u32[144,128]{1,0:T(1,128)}', space=vmem, size = 0x12000, scoped, tag = 'internal scratch']
  %s0 = inlined_call_operand.hbm [shape: bf16[8,32], index: 0, kind: input, shape index: {}]
  %s1 = inlined_call_operand.hbm [shape: bf16[32,128], index: 1, kind: input, shape index: {}]
  %s2 = inlined_call_operand.hbm [shape: bf16[128,128], index: 2, kind: input, shape index: {}]
  %s3 = inlined_call_operand.hbm [shape: bf16[128,128], index: 3, kind: input, shape index: {}]
  %s4 = inlined_call_operand.vmem [shape: f32[1,384], index: 4, kind: input, shape index: {}]
  %s5 = inlined_call_operand.hbm [shape: bf16[8,128], index: 5, kind: output, shape index: {}]
  %s6 = sld [smem:[#allocation0]]
  $region46: #{tpu_custom_call.1} parent=0
    _
  %s8 = ssub.s32 1, %s6
  %s9 = scalar_select 0, %s8, %s6
  $region1: #{tpu_custom_call.1} parent=0
    #allocation2 [shape = 'u8[4096]{0}', space=vmem, size = 0x1000, scoped, tag = 'input window, operand 0, single buffered']
    #allocation3 [shape = 's32[1]{0}', space=sflag, size = 0x4, scoped, tag = 'scoped memory for tpu_custom_call.1']
    #allocation4 [shape = 's32[1]{0}', space=sflag, size = 0x4, scoped, tag = 'scoped memory for tpu_custom_call.1']
    #allocation5 [shape = 'u8[8192]{0}', space=vmem, size = 0x2000, scoped, tag = 'input window, operand 1, single buffered']
    #allocation6 [shape = 's32[1]{0}', space=sflag, size = 0x4, scoped, tag = 'scoped memory for tpu_custom_call.1']
    #allocation7 [shape = 'u8[32768]{0}', space=vmem, size = 0x8000, scoped, tag = 'input window, operand 2, single buffered']
    #allocation8 [shape = 'u8[32768]{0}', space=vmem, size = 0x8000, scoped, tag = 'input window, operand 3, single buffered']
    #allocation9 [shape = 's32[1]{0}', space=sflag, size = 0x4, scoped, tag = 'scoped memory for tpu_custom_call.1']
    #allocation10 [shape = 'u8[4096]{0}', space=vmem, size = 0x1000, scoped, tag = 'output window, operand 0, single buffered']
    %10 = vsyncpa [#allocation3], 0
    %11 = vsyncpa [#allocation6], 0
    %12 = vsyncpa [#allocation9], 0
    %13 = vsyncpa [#allocation4], 0
    // Predicated region
    $region2: #{tpu_custom_call.1} parent=1 // pred_check
      _
    $region3: #{tpu_custom_call.1} parent=1 // pred_check_branch
      %15 = sbr.rel (0) target = $region5
    $region4: #{tpu_custom_call.1} parent=1 // pred_region
      %s17 = ssub.s32 128, 64
      %18 = vsyncadd [#allocation3], %s17
      %s19 = sshll.u32 [#allocation2], 4
      %s20 = int_to_ptr.vmem [resolvable:$true] %s19
      %25 = dma.hbm_to_vmem [thread:$0]  %s0, 64, %s20, [#allocation3], 64, 64, 4
    $region5: #{tpu_custom_call.1} parent=1 // pred_fallthru
      _
    // Predicated region
    $region6: #{tpu_custom_call.1} parent=1 // pred_check
      _
    $region7: #{tpu_custom_call.1} parent=1 // pred_check_branch
      %27 = sbr.rel (0) target = $region9
    $region8: #{tpu_custom_call.1} parent=1 // pred_region
      %s29 = ssub.s32 256, 256
      %30 = vsyncadd [#allocation6], %s29
      %s31 = sshll.u32 [#allocation5], 4
      %s32 = int_to_ptr.vmem [resolvable:$true] %s31
      %37 = dma.hbm_to_vmem [thread:$0]  %s1, 256, %s32, [#allocation6], 64, 64, 4
    $region9: #{tpu_custom_call.1} parent=1 // pred_fallthru
      _
    // Predicated region
    $region10: #{tpu_custom_call.1} parent=1 // pred_check
      _
    $region11: #{tpu_custom_call.1} parent=1 // pred_check_branch
      %39 = sbr.rel (0) target = $region13
    $region12: #{tpu_custom_call.1} parent=1 // pred_region
      %s41 = ssub.s32 1024, 1024
      %42 = vsyncadd [#allocation6], %s41
      %s43 = sshll.u32 [#allocation7], 4
      %s44 = int_to_ptr.vmem [resolvable:$true] %s43
      %49 = dma.hbm_to_vmem [thread:$0]  %s2, 1024, %s44, [#allocation6], 64, 64, 4
    $region13: #{tpu_custom_call.1} parent=1 // pred_fallthru
      _
    // Predicated region
    $region14: #{tpu_custom_call.1} parent=1 // pred_check
      _
    $region15: #{tpu_custom_call.1} parent=1 // pred_check_branch
      %51 = sbr.rel (0) target = $region17
    $region16: #{tpu_custom_call.1} parent=1 // pred_region
      %s53 = ssub.s32 1024, 1024
      %54 = vsyncadd [#allocation9], %s53
      %s55 = sshll.u32 [#allocation8], 4
      %s56 = int_to_ptr.vmem [resolvable:$true] %s55
      %61 = dma.hbm_to_vmem [thread:$0]  %s3, 1024, %s56, [#allocation9], 64, 64, 4
    $region17: #{tpu_custom_call.1} parent=1 // pred_fallthru
      _
    // Predicated region
    $region18: #{tpu_custom_call.1} parent=1 // pred_check
      _
    $region19: #{tpu_custom_call.1} parent=1 // pred_check_branch
      %63 = sbr.rel (0) target = $region21
    $region20: #{tpu_custom_call.1} parent=1 // pred_region
      _
    $region21: #{tpu_custom_call.1} parent=1 // pred_fallthru
      _
    // Predicated region
    $region22: #{tpu_custom_call.1} parent=1 // pred_check
      _
    $region23: #{tpu_custom_call.1} parent=1 // pred_check_branch
      %65 = sbr.rel (0) target = $region25
    $region24: #{tpu_custom_call.1} parent=1 // pred_region
      %66 = dma.done [#allocation3], 128
    $region25: #{tpu_custom_call.1} parent=1 // pred_fallthru
      _
    // Predicated region
    $region26: #{tpu_custom_call.1} parent=1 // pred_check
      _
    $region27: #{tpu_custom_call.1} parent=1 // pred_check_branch
      %68 = sbr.rel (0) target = $region29
    $region28: #{tpu_custom_call.1} parent=1 // pred_region
      %69 = dma.done [#allocation6], 256
    $region29: #{tpu_custom_call.1} parent=1 // pred_fallthru
      _
    // Predicated region
    $region30: #{tpu_custom_call.1} parent=1 // pred_check
      _
    $region31: #{tpu_custom_call.1} parent=1 // pred_check_branch
      %71 = sbr.rel (0) target = $region33
    $region32: #{tpu_custom_call.1} parent=1 // pred_region
      %72 = dma.done [#allocation6], 1024
    $region33: #{tpu_custom_call.1} parent=1 // pred_fallthru
      _
    // Predicated region
    $region34: #{tpu_custom_call.1} parent=1 // pred_check
      _
    $region35: #{tpu_custom_call.1} parent=1 // pred_check_branch
      %74 = sbr.rel (0) target = $region37
    $region36: #{tpu_custom_call.1} parent=1 // pred_region
      %75 = dma.done [#allocation9], 1024
    $region37: #{tpu_custom_call.1} parent=1 // pred_fallthru
      _
    %v77 = vld [vmem:[#allocation2] sm:$0xf]
    %v78 = vld [vmem:[#allocation2 + $0x4] sm:$0xf]
    %v79 = vld [vmem:[#allocation5] sm:$0xf]
    %v80 = vld [vmem:[#allocation5 + $0x4] sm:$0xf]
    %v81 = vld [vmem:[#allocation5 + $0x8] sm:$0xf]
    %v82 = vld [vmem:[#allocation5 + $0xc] sm:$0xf]
    %v83 = vld [vmem:[%s4] sm:$0x1]
    %v85 = vlaneseq
    %v86 = vshrl.u32 %v85, 7
    %v87 = vsub.s32 0, %v86
    %v88 = vrot.slane %v83, %v87
    %v92 = vunpack.c.l.b16 %v77
    %v93 = vunpack.c.l.b16 %v78
    %v94 = vpack.c.b16 %v93, %v92
    %v99 = vunpack.c.l.b16 %v79
    %v100 = vunpack.c.l.b16 %v80
    %v101 = vunpack.c.l.b16 %v81
    %v102 = vunpack.c.l.b16 %v82
    %v103 = vpack.c.b16 %v100, %v99
    %v104 = vpack.c.b16 %v102, %v101
    %vm107 = vcmask 261120
    %v109 = vsel %vm107, %v94, 0
    %111 = vmatprep.subr.bf16.mxu0 0
    %112 = vmatpush1.bf16.msra.mxu0 0
    %113 = vmatprep.subr.bf16.mxu0 0
    %114 = vmatpush1.bf16.msra.mxu0 0
    %115 = vmatprep.subr.bf16.mxu0 0
    %116 = vmatpush1.bf16.msra.mxu0 0
    %117 = vmatprep.subr.bf16.mxu0 0
    %118 = vmatpush1.bf16.msra.mxu0 0
    %119 = vmatprep.subr.bf16.mxu0 0
    %120 = vmatpush1.bf16.msra.mxu0 0
    %121 = vmatprep.subr.bf16.mxu0 0
    %122 = vmatpush1.bf16.msra.mxu0 0
    %123 = vmatprep.subr.bf16.mxu0 0
    %124 = vmatpush1.bf16.msra.mxu0 %v104
    %125 = vmatprep.subr.bf16.mxu0 0
    %126 = vmatpush1.bf16.msra.mxu0 %v103
    %127 = vmatprep.subr.bf16.mxu0 0
    %128 = vmatpush2.bf16.msra.mxu0 0
    %129 = vmatprep.subr.bf16.mxu0 0
    %130 = vmatpush2.bf16.msra.mxu0 0
    %131 = vmatprep.subr.bf16.mxu0 0
    %132 = vmatpush2.bf16.msra.mxu0 0
    %133 = vmatprep.subr.bf16.mxu0 0
    %134 = vmatpush2.bf16.msra.mxu0 0
    %135 = vmatprep.subr.bf16.mxu0 0
    %136 = vmatpush2.bf16.msra.mxu0 0
    %137 = vmatprep.subr.bf16.mxu0 0
    %138 = vmatpush2.bf16.msra.mxu0 0
    %139 = vmatprep.subr.bf16.mxu0 0
    %140 = vmatpush2.bf16.msra.mxu0 0
    %141 = vmatprep.subr.bf16.mxu0 0
    %142 = vmatpush2.bf16.msra.mxu0 0
    %143 = vmatprep.mubr.bf16.mxu0 0
    %144 = vmatmul.mubr.bf16.gmra.mxu0 %v109
    %v145 = vpop.f32.mrf.mxu0
    %v146 = vadd.f32 %v88, %v145
    %v147 = vpop.f32.mrf.mxu0
    %v148 = vpop.f32.mrf.mxu0
    %v149 = vadd.f32 %v88, %v148
    %v150 = vpop.f32.mrf.mxu0
    %151 = vdwg.mxu0
    %v152 = vmax.f32 %v146, 0.0
    %v153 = vmax.f32 %v149, 0.0
    %v154 = vpack.c.bf16 %v153, %v152
    %v155 = vld [vmem:[#allocation7] sm:$0xf]
    %v156 = vld [vmem:[#allocation7 + $0x4] sm:$0xf]
    %v157 = vld [vmem:[#allocation7 + $0x8] sm:$0xf]
    %v158 = vld [vmem:[#allocation7 + $0xc] sm:$0xf]
    %v159 = vld [vmem:[#allocation7 + $0x10] sm:$0xf]
    %v160 = vld [vmem:[#allocation7 + $0x14] sm:$0xf]
    %v161 = vld [vmem:[#allocation7 + $0x18] sm:$0xf]
    %v162 = vld [vmem:[#allocation7 + $0x1c] sm:$0xf]
    %v163 = vld [vmem:[#allocation7 + $0x20] sm:$0xf]
    %v164 = vld [vmem:[#allocation7 + $0x24] sm:$0xf]
    %v165 = vld [vmem:[#allocation7 + $0x28] sm:$0xf]
    %v166 = vld [vmem:[#allocation7 + $0x2c] sm:$0xf]
    %v167 = vld [vmem:[#allocation7 + $0x30] sm:$0xf]
    %v168 = vld [vmem:[#allocation7 + $0x34] sm:$0xf]
    %v169 = vld [vmem:[#allocation7 + $0x38] sm:$0xf]
    %v170 = vld [vmem:[#allocation7 + $0x3c] sm:$0xf]
    %v171 = vld [vmem:[%s4 + $0x1] sm:$0x1]
    %v173 = vlaneseq
    %v174 = vshrl.u32 %v173, 7
    %v175 = vsub.s32 0, %v174
    %v176 = vrot.slane %v171, %v175
    %v194 = vunpack.c.l.b16 %v155
    %v195 = vunpack.c.l.b16 %v156
    %v196 = vunpack.c.l.b16 %v157
    %v197 = vunpack.c.l.b16 %v158
    %v198 = vunpack.c.l.b16 %v159
    %v199 = vunpack.c.l.b16 %v160
    %v200 = vunpack.c.l.b16 %v161
    %v201 = vunpack.c.l.b16 %v162
    %v202 = vunpack.c.l.b16 %v163
    %v203 = vunpack.c.l.b16 %v164
    %v204 = vunpack.c.l.b16 %v165
    %v205 = vunpack.c.l.b16 %v166
    %v206 = vunpack.c.l.b16 %v167
    %v207 = vunpack.c.l.b16 %v168
    %v208 = vunpack.c.l.b16 %v169
    %v209 = vunpack.c.l.b16 %v170
    %v210 = vpack.c.b16 %v195, %v194
    %v211 = vpack.c.b16 %v197, %v196
    %v212 = vpack.c.b16 %v199, %v198
    %v213 = vpack.c.b16 %v201, %v200
    %v214 = vpack.c.b16 %v203, %v202
    %v215 = vpack.c.b16 %v205, %v204
    %v216 = vpack.c.b16 %v207, %v206
    %v217 = vpack.c.b16 %v209, %v208
    %226 = vmatprep.subr.bf16.mxu0 0
    %227 = vmatpush1.bf16.msra.mxu0 %v217
    %228 = vmatprep.subr.bf16.mxu0 0
    %229 = vmatpush1.bf16.msra.mxu0 %v216
    %230 = vmatprep.subr.bf16.mxu0 0
    %231 = vmatpush1.bf16.msra.mxu0 %v215
    %232 = vmatprep.subr.bf16.mxu0 0
    %233 = vmatpush1.bf16.msra.mxu0 %v214
    %234 = vmatprep.subr.bf16.mxu0 0
    %235 = vmatpush1.bf16.msra.mxu0 %v213
    %236 = vmatprep.subr.bf16.mxu0 0
    %237 = vmatpush1.bf16.msra.mxu0 %v212
    %238 = vmatprep.subr.bf16.mxu0 0
    %239 = vmatpush1.bf16.msra.mxu0 %v211
    %240 = vmatprep.subr.bf16.mxu0 0
    %241 = vmatpush1.bf16.msra.mxu0 %v210
    %242 = vmatprep.subr.bf16.mxu0 0
    %243 = vmatpush2.bf16.msra.mxu0 0
    %244 = vmatprep.subr.bf16.mxu0 0
    %245 = vmatpush2.bf16.msra.mxu0 0
    %246 = vmatprep.subr.bf16.mxu0 0
    %247 = vmatpush2.bf16.msra.mxu0 0
    %248 = vmatprep.subr.bf16.mxu0 0
    %249 = vmatpush2.bf16.msra.mxu0 0
    %250 = vmatprep.subr.bf16.mxu0 0
    %251 = vmatpush2.bf16.msra.mxu0 0
    %252 = vmatprep.subr.bf16.mxu0 0
    %253 = vmatpush2.bf16.msra.mxu0 0
    %254 = vmatprep.subr.bf16.mxu0 0
    %255 = vmatpush2.bf16.msra.mxu0 0
    %256 = vmatprep.subr.bf16.mxu0 0
    %257 = vmatpush2.bf16.msra.mxu0 0
    %258 = vmatprep.mubr.bf16.mxu0 0
    %259 = vmatmul.mubr.bf16.gmra.mxu0 %v154
    %v260 = vpop.f32.mrf.mxu0
    %v261 = vadd.f32 %v176, %v260
    %v262 = vpop.f32.mrf.mxu0
    %v263 = vpop.f32.mrf.mxu0
    %v264 = vadd.f32 %v176, %v263
    %v265 = vpop.f32.mrf.mxu0
    %266 = vdwg.mxu0
    %v267 = vmax.f32 %v261, 0.0
    %v268 = vmax.f32 %v264, 0.0
    %v269 = vpack.c.bf16 %v268, %v267
    %v270 = vld [vmem:[#allocation8] sm:$0xf]
    %v271 = vld [vmem:[#allocation8 + $0x4] sm:$0xf]
    %v272 = vld [vmem:[#allocation8 + $0x8] sm:$0xf]
    %v273 = vld [vmem:[#allocation8 + $0xc] sm:$0xf]
    %v274 = vld [vmem:[#allocation8 + $0x10] sm:$0xf]
    %v275 = vld [vmem:[#allocation8 + $0x14] sm:$0xf]
    %v276 = vld [vmem:[#allocation8 + $0x18] sm:$0xf]
    %v277 = vld [vmem:[#allocation8 + $0x1c] sm:$0xf]
    %v278 = vld [vmem:[#allocation8 + $0x20] sm:$0xf]
    %v279 = vld [vmem:[#allocation8 + $0x24] sm:$0xf]
    %v280 = vld [vmem:[#allocation8 + $0x28] sm:$0xf]
    %v281 = vld [vmem:[#allocation8 + $0x2c] sm:$0xf]
    %v282 = vld [vmem:[#allocation8 + $0x30] sm:$0xf]
    %v283 = vld [vmem:[#allocation8 + $0x34] sm:$0xf]
    %v284 = vld [vmem:[#allocation8 + $0x38] sm:$0xf]
    %v285 = vld [vmem:[#allocation8 + $0x3c] sm:$0xf]
    %v286 = vld [vmem:[%s4 + $0x2] sm:$0x1]
    %v288 = vlaneseq
    %v289 = vshrl.u32 %v288, 7
    %v290 = vsub.s32 0, %v289
    %v291 = vrot.slane %v286, %v290
    %v309 = vunpack.c.l.b16 %v270
    %v310 = vunpack.c.l.b16 %v271
    %v311 = vunpack.c.l.b16 %v272
    %v312 = vunpack.c.l.b16 %v273
    %v313 = vunpack.c.l.b16 %v274
    %v314 = vunpack.c.l.b16 %v275
    %v315 = vunpack.c.l.b16 %v276
    %v316 = vunpack.c.l.b16 %v277
    %v317 = vunpack.c.l.b16 %v278
    %v318 = vunpack.c.l.b16 %v279
    %v319 = vunpack.c.l.b16 %v280
    %v320 = vunpack.c.l.b16 %v281
    %v321 = vunpack.c.l.b16 %v282
    %v322 = vunpack.c.l.b16 %v283
    %v323 = vunpack.c.l.b16 %v284
    %v324 = vunpack.c.l.b16 %v285
    %v325 = vpack.c.b16 %v310, %v309
    %v326 = vpack.c.b16 %v312, %v311
    %v327 = vpack.c.b16 %v314, %v313
    %v328 = vpack.c.b16 %v316, %v315
    %v329 = vpack.c.b16 %v318, %v317
    %v330 = vpack.c.b16 %v320, %v319
    %v331 = vpack.c.b16 %v322, %v321
    %v332 = vpack.c.b16 %v324, %v323
    %341 = vmatprep.subr.bf16.mxu0 0
    %342 = vmatpush1.bf16.msra.mxu0 %v332
    %343 = vmatprep.subr.bf16.mxu0 0
    %344 = vmatpush1.bf16.msra.mxu0 %v331
    %345 = vmatprep.subr.bf16.mxu0 0
    %346 = vmatpush1.bf16.msra.mxu0 %v330
    %347 = vmatprep.subr.bf16.mxu0 0
    %348 = vmatpush1.bf16.msra.mxu0 %v329
    %349 = vmatprep.subr.bf16.mxu0 0
    %350 = vmatpush1.bf16.msra.mxu0 %v328
    %351 = vmatprep.subr.bf16.mxu0 0
    %352 = vmatpush1.bf16.msra.mxu0 %v327
    %353 = vmatprep.subr.bf16.mxu0 0
    %354 = vmatpush1.bf16.msra.mxu0 %v326
    %355 = vmatprep.subr.bf16.mxu0 0
    %356 = vmatpush1.bf16.msra.mxu0 %v325
    %357 = vmatprep.subr.bf16.mxu0 0
    %358 = vmatpush2.bf16.msra.mxu0 0
    %359 = vmatprep.subr.bf16.mxu0 0
    %360 = vmatpush2.bf16.msra.mxu0 0
    %361 = vmatprep.subr.bf16.mxu0 0
    %362 = vmatpush2.bf16.msra.mxu0 0
    %363 = vmatprep.subr.bf16.mxu0 0
    %364 = vmatpush2.bf16.msra.mxu0 0
    %365 = vmatprep.subr.bf16.mxu0 0
    %366 = vmatpush2.bf16.msra.mxu0 0
    %367 = vmatprep.subr.bf16.mxu0 0
    %368 = vmatpush2.bf16.msra.mxu0 0
    %369 = vmatprep.subr.bf16.mxu0 0
    %370 = vmatpush2.bf16.msra.mxu0 0
    %371 = vmatprep.subr.bf16.mxu0 0
    %372 = vmatpush2.bf16.msra.mxu0 0
    %373 = vmatprep.mubr.bf16.mxu0 0
    %374 = vmatmul.mubr.bf16.gmra.mxu0 %v269
    %v375 = vpop.f32.mrf.mxu0
    %v376 = vadd.f32 %v291, %v375
    %v377 = vpop.f32.mrf.mxu0
    %v378 = vpop.f32.mrf.mxu0
    %v379 = vadd.f32 %v291, %v378
    %v380 = vpop.f32.mrf.mxu0
    %381 = vdwg.mxu0
    %v382 = vpack.c.bf16 %v379, %v376
    %v384 = vunpack.c.l.b16 %v382
    %v385 = vunpack.c.h.b16 %v382
    %v386 = vpack.c.b16 %v384, %v384
    %v387 = vpack.c.b16 %v385, %v385
    %390 = vst [vmem:[#allocation10] sm:$0xf] %v386
    %391 = vst [vmem:[#allocation10 + $0x4] sm:$0xf] %v387
    // Predicated region
    $region38: #{tpu_custom_call.1} parent=1 // pred_check
      _
    $region39: #{tpu_custom_call.1} parent=1 // pred_check_branch
      %393 = sbr.rel (0) target = $region41
    $region40: #{tpu_custom_call.1} parent=1 // pred_region
      %s395 = ssub.s32 128, 64
      %396 = vsyncadd [#allocation4], %s395
      %s397 = sshll.u32 [#allocation10], 4
      %s398 = int_to_ptr.vmem [resolvable:$true] %s397
      %403 = dma.vmem_to_hbm [thread:$0]  %s398, 64, %s5, [#allocation4], 64, 64, 4
    $region41: #{tpu_custom_call.1} parent=1 // pred_fallthru
      _
    // Predicated region
    $region42: #{tpu_custom_call.1} parent=1 // pred_check
      _
    $region43: #{tpu_custom_call.1} parent=1 // pred_check_branch
      %405 = sbr.rel (0) target = $region45
    $region44: #{tpu_custom_call.1} parent=1 // pred_region
      %406 = dma.done [#allocation4], 128
    $region45: #{tpu_custom_call.1} parent=1 // pred_fallthru
      _
    %407 = vsyncpa [#allocation3], 1
    %408 = vsyncpa [#allocation6], 1
    %409 = vsyncpa [#allocation9], 1
    %410 = vsyncpa [#allocation4], 1

</llo_original>
